<compile_context>
chip_gen: v7x
topology: tpu7x:2x2x1
jax: 0.10.0
libtpu: 0.0.40
codegen_flags: <defaults>
</compile_context>

<pallas_src>
import functools

import numpy as np
import jax
import jax.numpy as jnp
from jax import lax
from jax.experimental import pallas as pl
from jax.experimental.pallas import tpu as pltpu


def _round_up(x, m):
    return (x + m - 1) // m * m


# --------------------------------------------------------------------------
# In-kernel helpers
# --------------------------------------------------------------------------
def _masked_softmax(x, k_valid):
    """Row softmax over the first k_valid columns; padded columns -> 0."""
    col = lax.broadcasted_iota(jnp.int32, x.shape, 1)
    xm = jnp.where(col < k_valid, x, -jnp.inf)
    m = jnp.max(xm, axis=-1, keepdims=True)
    e = jnp.exp(xm - m)
    # Exact reciprocal: the softmax runs once per batch tile, so the approx
    # EUP variant saves nothing and only degrades sampling fidelity.
    return e * pl.reciprocal(jnp.sum(e, axis=-1, keepdims=True))


# --------------------------------------------------------------------------
# Kernel A: wkk fully VMEM-resident.  Grid: (batch tiles,).
# Outputs r0, r1, r1s, s0 as (tb, Kp) blocks.
# --------------------------------------------------------------------------
def _scores_resident_kernel(q0_ref, q1_ref, c0_ref, c1_ref, wkk_ref,
                            r0_ref, r1_ref, r1s_ref, s0_ref, *, k_valid):
    dn = (((1,), (1,)), ((), ()))   # contract last dims -> no transposes
    r0 = lax.dot_general(q0_ref[...], c0_ref[...], dn,
                         preferred_element_type=jnp.float32)
    r1 = lax.dot_general(q1_ref[...], c1_ref[...], dn,
                         preferred_element_type=jnp.float32)
    r0s = _masked_softmax(r0, k_valid)
    r1s = _masked_softmax(r1, k_valid)
    r0_ref[...] = r0
    r1_ref[...] = r1
    r1s_ref[...] = r1s
    # s0 = (r1s @ wkk.T) * r0s  -- one (tb,Kp)x(Kp,Kp) MXU dot, wkk read once.
    s0 = lax.dot_general(r1s.astype(jnp.bfloat16), wkk_ref[...], dn,
                         preferred_element_type=jnp.float32)
    s0_ref[...] = s0 * r0s


# --------------------------------------------------------------------------
# Kernel B: wkk streamed in (tk, Kp) row blocks.  Grid: (batch tiles, Kp/tk).
# r0/r1/r1s/s0 are emitted as lane-dense (tb, tk) column blocks.
# --------------------------------------------------------------------------
def _scores_streamed_kernel(q0_ref, q1_ref, c0_ref, c1_ref, wkk_ref,
                            r0_ref, r1_ref, r1s_ref, s0_ref,
                            r0_sc, r1_sc, r0s_sc, r1s_sc, r1s_bf_sc,
                            *, k_valid):
    j = pl.program_id(1)
    dn = (((1,), (1,)), ((), ()))

    @pl.when(j == 0)
    def _():
        r0 = lax.dot_general(q0_ref[...], c0_ref[...], dn,
                             preferred_element_type=jnp.float32)
        r1 = lax.dot_general(q1_ref[...], c1_ref[...], dn,
                             preferred_element_type=jnp.float32)
        r0s = _masked_softmax(r0, k_valid)
        r1s = _masked_softmax(r1, k_valid)
        r0_sc[...] = r0
        r1_sc[...] = r1
        r0s_sc[...] = r0s
        r1s_sc[...] = r1s
        r1s_bf_sc[...] = r1s.astype(jnp.bfloat16)   # hoisted: cast once per tile

    tk = s0_ref.shape[1]
    off = pl.multiple_of(j * tk, tk)
    # j-tiled writeback of the per-batch-tile resident results (spreads the
    # HBM writeback across the streaming loop and halves output buffer VMEM).
    r0_ref[...] = r0_sc[:, pl.ds(off, tk)]
    r1_ref[...] = r1_sc[:, pl.ds(off, tk)]
    r1s_ref[...] = r1s_sc[:, pl.ds(off, tk)]
    # s0[:, j-block] = (r1s @ wkk[j-block, :].T) * r0s[:, j-block]
    s0_blk = lax.dot_general(r1s_bf_sc[...], wkk_ref[...], dn,
                             preferred_element_type=jnp.float32)
    s0_ref[...] = s0_blk * r0s_sc[:, pl.ds(off, tk)]


# --------------------------------------------------------------------------
# Tile / mode planning (generation-aware VMEM budget)
# --------------------------------------------------------------------------
def _plan_tiles(B, Kp, Dhp, force_streamed=False):
    """Pick (mode, tb, tk, vmem_limit_bytes)."""
    try:
        cap = int(pltpu.get_tpu_info().vmem_capacity_bytes)
    except Exception:                      # unknown generation: assume v7x (64 MiB)
        cap = 64 << 20
    budget = max(cap - (16 << 20), 32 << 20)   # leave compiler-scratch headroom

    tb_full = _round_up(B, 8)
    tb = min(256, tb_full)
    if tb == tb_full and tb > 128:
        # Keep >=2 batch tiles so both v7x TensorCores get work.
        tb = _round_up((B + 1) // 2, 16)

    def resident_bytes(t):
        # conservative: count double buffers for everything
        return (2 * 2 * t * Dhp * 2          # q0, q1 (bf16)
                + 2 * 2 * Kp * Dhp * 2       # c0, c1 (bf16)
                + 2 * Kp * Kp * 2            # wkk (bf16)
                + 4 * 2 * t * Kp * 4)        # r0, r1, r1s, s0 outputs (f32)

    def streamed_bytes(t, tk):
        return (2 * 2 * t * Dhp * 2
                + 2 * 2 * Kp * Dhp * 2
                + 2 * tk * Kp * 2            # wkk row block
                + 4 * 2 * t * tk * 4         # j-tiled outputs
                + 4 * t * Kp * 4 + t * Kp * 2)   # f32 + bf16 scratch

    if not force_streamed:
        floor_tb = min(64, tb)
        tb_r = tb
        while True:
            if resident_bytes(tb_r) <= budget:
                return "resident", tb_r, Kp, budget
            if tb_r <= floor_tb:
                break
            tb_r = max(floor_tb, _round_up(tb_r // 2, 16))

    if force_streamed:
        tk = 128                              # smallest lane-dense block (tests)
    elif Kp % 512 == 0:
        tk = 512
    elif Kp % 256 == 0:
        tk = 256
    else:
        tk = 128
    while tb > 16 and streamed_bytes(tb, tk) > budget:
        tb = max(16, _round_up(tb // 2, 16))
    return "streamed", tb, tk, budget


def _sampler_scores(q0p, q1p, c0_pad, c1_pad, wkk_pad, k_valid, mode, tb, tk,
                    vmem_limit):
    Bp, Dhp = q0p.shape
    Kp = c0_pad.shape[0]
    nb = Bp // tb
    f32 = jnp.float32
    out_shape = tuple(jax.ShapeDtypeStruct((Bp, Kp), f32) for _ in range(4))

    if mode == "resident":
        kernel = functools.partial(_scores_resident_kernel, k_valid=k_valid)
        grid_spec = pltpu.PrefetchScalarGridSpec(
            num_scalar_prefetch=0,
            grid=(nb,),
            in_specs=[
                pl.BlockSpec((tb, Dhp), lambda i: (i, 0)),    # q0 (bf16)
                pl.BlockSpec((tb, Dhp), lambda i: (i, 0)),    # q1 (bf16)
                pl.BlockSpec((Kp, Dhp), lambda i: (0, 0)),    # c0 (bf16, fetched once)
                pl.BlockSpec((Kp, Dhp), lambda i: (0, 0)),    # c1 (bf16, fetched once)
                pl.BlockSpec((Kp, Kp), lambda i: (0, 0)),     # wkk (bf16, resident)
            ],
            out_specs=tuple(pl.BlockSpec((tb, Kp), lambda i: (i, 0))
                            for _ in range(4)),               # r0, r1, r1s, s0
        )
        dims = ("parallel",)
    else:
        nj = Kp // tk
        kernel = functools.partial(_scores_streamed_kernel, k_valid=k_valid)
        grid_spec = pltpu.PrefetchScalarGridSpec(
            num_scalar_prefetch=0,
            grid=(nb, nj),
            in_specs=[
                pl.BlockSpec((tb, Dhp), lambda i, j: (i, 0)),  # q0 (bf16)
                pl.BlockSpec((tb, Dhp), lambda i, j: (i, 0)),  # q1 (bf16)
                pl.BlockSpec((Kp, Dhp), lambda i, j: (0, 0)),  # c0 (bf16)
                pl.BlockSpec((Kp, Dhp), lambda i, j: (0, 0)),  # c1 (bf16)
                pl.BlockSpec((tk, Kp), lambda i, j: (j, 0)),   # wkk row block
            ],
            out_specs=tuple(pl.BlockSpec((tb, tk), lambda i, j: (i, j))
                            for _ in range(4)),                # r0, r1, r1s, s0
            scratch_shapes=[
                pltpu.VMEM((tb, Kp), f32),            # r0
                pltpu.VMEM((tb, Kp), f32),            # r1
                pltpu.VMEM((tb, Kp), f32),            # r0s
                pltpu.VMEM((tb, Kp), f32),            # r1s
                pltpu.VMEM((tb, Kp), jnp.bfloat16),   # r1s (bf16, hoisted cast)
            ],
        )
        dims = ("parallel", "arbitrary")

    return pl.pallas_call(
        kernel,
        out_shape=out_shape,
        grid_spec=grid_spec,
        compiler_params=pltpu.CompilerParams(
            dimension_semantics=dims,
            vmem_limit_bytes=int(vmem_limit),
        ),
    )(q0p, q1p, c0_pad, c1_pad, wkk_pad)


class SoftmaxApprSamplerUniformPallas:
    """JAX/Pallas port of torchrec SoftmaxApprSamplerUniform (scorer_fn=None)."""

    def __init__(self, num_items, num_clusters):
        self.num_items = num_items
        self.K = num_clusters

    # ---- `update`: deterministic synthetic "kmeans" + index construction ----
    def update(self, item_embs, max_iter=5):
        X = np.asarray(item_embs, dtype=np.float32)
        N, D = X.shape
        K = self.K
        e1, e2 = X[:, : D // 2], X[:, D // 2:]

        def simple_kmeans(E, K, iters):
            C = E[:K].copy()  # deterministic init (first K rows)
            for _ in range(iters):
                dist = ((E * E).sum(-1, keepdims=True)
                        - 2.0 * E @ C.T
                        + (C * C).sum(-1)[None, :])
                a = dist.argmin(-1)
                M = np.zeros((E.shape[0], K), dtype=np.float32)
                M[np.arange(E.shape[0]), a] = 1.0
                cnt = M.sum(0)
                newC = (M.T @ E) / np.maximum(cnt[:, None], 1.0)
                newC[cnt < 0.5] = C[cnt < 0.5]  # deterministic empty-cluster handling
                C = newC
            return C.astype(np.float32), a.astype(np.int32), M

        c0, cd0, cd0m = simple_kmeans(e1, K, max_iter)
        c1, cd1, cd1m = simple_kmeans(e2, K, max_iter)

        Dh = D // 2
        self.Dh = Dh
        self.c0_ = jnp.asarray(
            np.concatenate([np.zeros((1, Dh), np.float32), c0], axis=0))
        self.c1_ = jnp.asarray(
            np.concatenate([np.zeros((1, Dh), np.float32), c1], axis=0))
        self.cd0 = jnp.asarray(np.concatenate([[-1], cd0]).astype(np.int32) + 1)
        self.cd1 = jnp.asarray(np.concatenate([[-1], cd1]).astype(np.int32) + 1)

        # construct_index(cd01, K)
        cd01 = cd0.astype(np.int64) * K + cd1.astype(np.int64)
        order = np.argsort(cd01, kind="stable")
        counts = np.bincount(cd01, minlength=K * K)
        indptr = np.concatenate([[0], np.cumsum(counts)]).astype(np.int32)
        self.indices = jnp.asarray(order.astype(np.int32))
        self.indptr = jnp.asarray(indptr)

        # scorer is not EuclideanScorer -> wkk = cd0m.T @ cd1m
        wkk = (cd0m.T @ cd1m).astype(np.float32)
        self.wkk = jnp.asarray(wkk)                     # f32, used for wrapper gather

        # --- TPU-friendly padded / bf16 copies for the Pallas kernels ---
        self.Kp = _round_up(K, 128)
        self.Dhp = _round_up(Dh, 128)

        c0_pad = np.zeros((self.Kp, self.Dhp), np.float32)
        c1_pad = np.zeros((self.Kp, self.Dhp), np.float32)
        c0_pad[:K, :Dh] = c0
        c1_pad[:K, :Dh] = c1
        wkk_pad = np.zeros((self.Kp, self.Kp), np.float32)
        wkk_pad[:K, :K] = wkk
        self.c0_pad = jnp.asarray(c0_pad, dtype=jnp.bfloat16)
        self.c1_pad = jnp.asarray(c1_pad, dtype=jnp.bfloat16)
        self.wkk_pad = jnp.asarray(wkk_pad, dtype=jnp.bfloat16)

    # ---- cluster-score kernel launcher ----
    def _scores(self, q0, q1, force_streamed=False):
        B = q0.shape[0]
        Dh, K = self.Dh, self.K
        mode, tb, tk, vmem_limit = _plan_tiles(B, self.Kp, self.Dhp, force_streamed)
        Bp = _round_up(B, tb)
        # bf16 query tiles (the MXU operand is bf16 anyway) -> half the DMA bytes
        q0p = jnp.zeros((Bp, self.Dhp), jnp.bfloat16).at[:B, :Dh].set(
            q0.astype(jnp.bfloat16))
        q1p = jnp.zeros((Bp, self.Dhp), jnp.bfloat16).at[:B, :Dh].set(
            q1.astype(jnp.bfloat16))
        r0p, r1p, r1sp, s0p = _sampler_scores(
            q0p, q1p, self.c0_pad, self.c1_pad, self.wkk_pad,
            K, mode, tb, tk, vmem_limit)
        return r0p[:B, :K], r1p[:B, :K], r1sp[:B, :K], s0p[:B, :K]

    # ---- forward ----
    def forward(self, query, num_neg, pos_items, key, force_streamed=False):
        D = query.shape[-1]
        q = query.reshape(-1, D).astype(jnp.float32)
        B = q.shape[0]
        Dh, K = self.Dh, self.K
        q0, q1 = q[:, :Dh], q[:, Dh:]

        # positive score (compute_item_p, else-branch) — tiny gather+dot in
        # exact f32; keeping it out of the kernel keeps its outputs lane-dense.
        k0p = self.cd0[pos_items]
        k1p = self.cd1[pos_items]
        pos_r = (jnp.sum(self.c0_[k0p] * q0, axis=-1)
                 + jnp.sum(self.c1_[k1p] * q1, axis=-1))

        # r0, r1, softmax(r1), s0 = softmax(r1) @ wkk.T * softmax(r0) from Pallas
        r0, r1, r1s, s0 = self._scores(q0, q1, force_streamed=force_streamed)

        key0, key1, key2 = jax.random.split(key, 3)

        # k0 ~ multinomial(s0, num_neg, replacement=True); clamp guards rows of
        # all-zero cluster-pair weights against -inf logits / NaNs.
        logits0 = jnp.log(jnp.maximum(s0, 1e-30))
        k0 = jax.random.categorical(key0, logits0, axis=-1,
                                    shape=(num_neg, B)).T            # (B, num_neg)
        p0 = jnp.take_along_axis(r0, k0, axis=-1)

        subwkk = self.wkk[k0]                                        # (B, num_neg, K)
        s1 = subwkk * r1s[:, None, :]
        logits1 = jnp.log(jnp.maximum(s1.reshape(-1, K), 1e-30))
        k1 = jax.random.categorical(key1, logits1, axis=-1).reshape(B, num_neg)
        p1 = jnp.take_along_axis(r1, k1, axis=-1)

        k01 = k0 * K + k1
        p01 = p0 + p1

        # sample_item (no popularity table): uniform item within the (k0,k1) bucket
        # TODO(synk): empty buckets (item_cnt==0) read the neighbouring bucket's
        # first item, matching the reference implementation's behaviour.
        item_cnt = self.indptr[k01 + 1] - self.indptr[k01]
        u = jax.random.uniform(key2, k01.shape, dtype=jnp.float32)
        item_idx = jnp.floor(item_cnt.astype(jnp.float32) * u).astype(jnp.int32)
        neg_items = self.indices[item_idx + self.indptr[k01]] + 1
        neg_prob = p01

        pos_prop = pos_r.reshape(query.shape[:-1])
        return (pos_prop,
                neg_items.reshape(*query.shape[:-1], -1),
                neg_prob.reshape(*query.shape[:-1], -1))


if __name__ == "__main__":
    key = jax.random.PRNGKey(0)
    (k_emb, k_q, k_pos, k_samp,
     k_emb2, k_q2, k_pos2, k_samp2) = jax.random.split(key, 8)

    # ---- test 1: tiny config (hits the wkk-resident path) ----
    num_items, K, D, B, num_neg = 64, 8, 32, 8, 4
    item_embs = jax.random.normal(k_emb, (num_items, D), dtype=jnp.float32)
    sampler = SoftmaxApprSamplerUniformPallas(num_items, K)
    sampler.update(np.asarray(item_embs))

    query = jax.random.normal(k_q, (B, D), dtype=jnp.float32)
    pos_items = jax.random.randint(k_pos, (B,), 1, num_items + 1)
    pos_prop, neg_items, neg_prob = sampler.forward(query, num_neg, pos_items, k_samp)
    jax.block_until_ready((pos_prop, neg_items, neg_prob))

    assert pos_prop.shape == (B,)
    assert neg_items.shape == (B, num_neg)
    assert neg_prob.shape == (B, num_neg)
    assert bool(jnp.all(jnp.isfinite(pos_prop)))
    assert bool(jnp.all(jnp.isfinite(neg_prob)))
    assert bool(jnp.all((neg_items >= 1) & (neg_items <= num_items)))

    # ---- test 2: Kp=256 — exercise BOTH kernel paths and cross-check them ----
    num_items2, K2, D2, B2, num_neg2 = 256, 160, 64, 24, 6
    item_embs2 = jax.random.normal(k_emb2, (num_items2, D2), dtype=jnp.float32)
    sampler2 = SoftmaxApprSamplerUniformPallas(num_items2, K2)
    sampler2.update(np.asarray(item_embs2))

    query2 = jax.random.normal(k_q2, (B2, D2), dtype=jnp.float32)
    q2 = query2.reshape(-1, D2)
    q0_2, q1_2 = q2[:, : D2 // 2], q2[:, D2 // 2:]
    res_scores = sampler2._scores(q0_2, q1_2, force_streamed=False)
    str_scores = sampler2._scores(q0_2, q1_2, force_streamed=True)
    jax.block_until_ready((res_scores, str_scores))
    for a, b in zip(res_scores, str_scores):
        np.testing.assert_allclose(np.asarray(a), np.asarray(b),
                                   rtol=2e-2, atol=2e-3)

    pos_items2 = jax.random.randint(k_pos2, (B2,), 1, num_items2 + 1)
    out2 = sampler2.forward(query2, num_neg2, pos_items2, k_samp2)
    jax.block_until_ready(out2)
    assert out2[0].shape == (B2,)
    assert out2[1].shape == (B2, num_neg2)
    assert out2[2].shape == (B2, num_neg2)
    assert bool(jnp.all(jnp.isfinite(out2[2])))
    assert bool(jnp.all((out2[1] >= 1) & (out2[1] <= num_items2)))

    print("KERNEL_OK")
</pallas_src>

<mosaic_0001>
module attributes {stable_mosaic.version = 11 : i64} {
  func.func @_scores_resident_kernel(%arg0: i32, %arg1: memref<8x128xbf16, #tpu.memory_space<vmem>>, %arg2: memref<8x128xbf16, #tpu.memory_space<vmem>>, %arg3: memref<128x128xbf16, #tpu.memory_space<vmem>>, %arg4: memref<128x128xbf16, #tpu.memory_space<vmem>>, %arg5: memref<128x128xbf16, #tpu.memory_space<vmem>>, %arg6: memref<8x128xf32, #tpu.memory_space<vmem>>, %arg7: memref<8x128xf32, #tpu.memory_space<vmem>>, %arg8: memref<8x128xf32, #tpu.memory_space<vmem>>, %arg9: memref<8x128xf32, #tpu.memory_space<vmem>>) attributes {dimension_semantics = [#tpu.dimension_semantics<parallel>], iteration_bounds = array<i64: 1>, scalar_prefetch = 0 : i64, scratch_operands = 0 : i64, tpu.core_type = #tpu.core_type<tc>, window_params = [{transform_indices = @transform_0, window_bounds = array<i64: 8, 128>}, {transform_indices = @transform_1, window_bounds = array<i64: 8, 128>}, {pipeline_mode = #tpu.pipeline_mode<synchronous>, transform_indices = @transform_2, window_bounds = array<i64: 128, 128>}, {pipeline_mode = #tpu.pipeline_mode<synchronous>, transform_indices = @transform_3, window_bounds = array<i64: 128, 128>}, {pipeline_mode = #tpu.pipeline_mode<synchronous>, transform_indices = @transform_4, window_bounds = array<i64: 128, 128>}, {transform_indices = @transform_5, window_bounds = array<i64: 8, 128>}, {transform_indices = @transform_6, window_bounds = array<i64: 8, 128>}, {transform_indices = @transform_7, window_bounds = array<i64: 8, 128>}, {transform_indices = @transform_8, window_bounds = array<i64: 8, 128>}]} {
    %c0 = arith.constant 0 : index
    %c0_0 = arith.constant 0 : index
    %0 = vector.load %arg1[%c0, %c0_0] : memref<8x128xbf16, #tpu.memory_space<vmem>>, vector<8x128xbf16>
    %c0_1 = arith.constant 0 : index
    %c0_2 = arith.constant 0 : index
    %1 = vector.load %arg3[%c0_1, %c0_2] : memref<128x128xbf16, #tpu.memory_space<vmem>>, vector<128x128xbf16>
    %cst = arith.constant dense<0.000000e+00> : vector<8x128xf32>
    %2 = tpu.matmul %0, %1, %cst {dimension_numbers = #tpu.dot_dimension_numbers<[1], [1], [0], [0], [0, 0, 1, 0], [], []>} : vector<8x128xbf16>, vector<128x128xbf16>, vector<8x128xf32> -> vector<8x128xf32>
    %c0_3 = arith.constant 0 : index
    %c0_4 = arith.constant 0 : index
    %3 = vector.load %arg2[%c0_3, %c0_4] : memref<8x128xbf16, #tpu.memory_space<vmem>>, vector<8x128xbf16>
    %c0_5 = arith.constant 0 : index
    %c0_6 = arith.constant 0 : index
    %4 = vector.load %arg4[%c0_5, %c0_6] : memref<128x128xbf16, #tpu.memory_space<vmem>>, vector<128x128xbf16>
    %cst_7 = arith.constant dense<0.000000e+00> : vector<8x128xf32>
    %5 = tpu.matmul %3, %4, %cst_7 {dimension_numbers = #tpu.dot_dimension_numbers<[1], [1], [0], [0], [0, 0, 1, 0], [], []>} : vector<8x128xbf16>, vector<128x128xbf16>, vector<8x128xf32> -> vector<8x128xf32>
    %6 = tpu.iota {dimensions = array<i32: 1>} : vector<8x128xi32>
    %c8_i32 = arith.constant 8 : i32
    %7 = vector.broadcast %c8_i32 : i32 to vector<8x128xi32>
    %8 = arith.cmpi slt, %6, %7 : vector<8x128xi32>
    %cst_8 = arith.constant 0xFF800000 : f32
    %9 = vector.broadcast %cst_8 : f32 to vector<8x128xf32>
    %10 = arith.select %8, %2, %9 : vector<8x128xi1>, vector<8x128xf32>
    %cst_9 = arith.constant dense<0xFF800000> : vector<8xf32>
    %11 = vector.multi_reduction <maximumf>, %10, %cst_9 [1] : vector<8x128xf32> to vector<8xf32>
    %12 = vector.shape_cast %11 : vector<8xf32> to vector<8x1xf32>
    %13 = vector.broadcast %12 : vector<8x1xf32> to vector<8x128xf32>
    %14 = arith.subf %10, %13 : vector<8x128xf32>
    %15 = math.exp %14 : vector<8x128xf32>
    %cst_10 = arith.constant dense<0.000000e+00> : vector<8xf32>
    %16 = vector.multi_reduction <add>, %15, %cst_10 [1] : vector<8x128xf32> to vector<8xf32>
    %17 = vector.shape_cast %16 : vector<8xf32> to vector<8x1xf32>
    %18 = tpu.reciprocal %17 : vector<8x1xf32> -> vector<8x1xf32>
    %19 = vector.broadcast %18 : vector<8x1xf32> to vector<8x128xf32>
    %20 = arith.mulf %15, %19 : vector<8x128xf32>
    %21 = tpu.iota {dimensions = array<i32: 1>} : vector<8x128xi32>
    %c8_i32_11 = arith.constant 8 : i32
    %22 = vector.broadcast %c8_i32_11 : i32 to vector<8x128xi32>
    %23 = arith.cmpi slt, %21, %22 : vector<8x128xi32>
    %cst_12 = arith.constant 0xFF800000 : f32
    %24 = vector.broadcast %cst_12 : f32 to vector<8x128xf32>
    %25 = arith.select %23, %5, %24 : vector<8x128xi1>, vector<8x128xf32>
    %cst_13 = arith.constant dense<0xFF800000> : vector<8xf32>
    %26 = vector.multi_reduction <maximumf>, %25, %cst_13 [1] : vector<8x128xf32> to vector<8xf32>
    %27 = vector.shape_cast %26 : vector<8xf32> to vector<8x1xf32>
    %28 = vector.broadcast %27 : vector<8x1xf32> to vector<8x128xf32>
    %29 = arith.subf %25, %28 : vector<8x128xf32>
    %30 = math.exp %29 : vector<8x128xf32>
    %cst_14 = arith.constant dense<0.000000e+00> : vector<8xf32>
    %31 = vector.multi_reduction <add>, %30, %cst_14 [1] : vector<8x128xf32> to vector<8xf32>
    %32 = vector.shape_cast %31 : vector<8xf32> to vector<8x1xf32>
    %33 = tpu.reciprocal %32 : vector<8x1xf32> -> vector<8x1xf32>
    %34 = vector.broadcast %33 : vector<8x1xf32> to vector<8x128xf32>
    %35 = arith.mulf %30, %34 : vector<8x128xf32>
    %c0_15 = arith.constant 0 : index
    %c0_16 = arith.constant 0 : index
    %36 = vector.load %arg6[%c0_15, %c0_16] : memref<8x128xf32, #tpu.memory_space<vmem>>, vector<8x128xf32>
    tpu.vector_store %arg6[%c0_15, %c0_16], %2 {strides = array<i32>} : memref<8x128xf32, #tpu.memory_space<vmem>>, vector<8x128xf32>,
    %c0_17 = arith.constant 0 : index
    %c0_18 = arith.constant 0 : index
    %37 = vector.load %arg7[%c0_17, %c0_18] : memref<8x128xf32, #tpu.memory_space<vmem>>, vector<8x128xf32>
    tpu.vector_store %arg7[%c0_17, %c0_18], %5 {strides = array<i32>} : memref<8x128xf32, #tpu.memory_space<vmem>>, vector<8x128xf32>,
    %c0_19 = arith.constant 0 : index
    %c0_20 = arith.constant 0 : index
    %38 = vector.load %arg8[%c0_19, %c0_20] : memref<8x128xf32, #tpu.memory_space<vmem>>, vector<8x128xf32>
    tpu.vector_store %arg8[%c0_19, %c0_20], %35 {strides = array<i32>} : memref<8x128xf32, #tpu.memory_space<vmem>>, vector<8x128xf32>,
    %39 = arith.truncf %35 : vector<8x128xf32> to vector<8x128xbf16>
    %c0_21 = arith.constant 0 : index
    %c0_22 = arith.constant 0 : index
    %40 = vector.load %arg5[%c0_21, %c0_22] : memref<128x128xbf16, #tpu.memory_space<vmem>>, vector<128x128xbf16>
    %cst_23 = arith.constant dense<0.000000e+00> : vector<8x128xf32>
    %41 = tpu.matmul %39, %40, %cst_23 {dimension_numbers = #tpu.dot_dimension_numbers<[1], [1], [0], [0], [0, 0, 1, 0], [], []>} : vector<8x128xbf16>, vector<128x128xbf16>, vector<8x128xf32> -> vector<8x128xf32>
    %42 = arith.mulf %41, %20 : vector<8x128xf32>
    %c0_24 = arith.constant 0 : index
    %c0_25 = arith.constant 0 : index
    %43 = vector.load %arg9[%c0_24, %c0_25] : memref<8x128xf32, #tpu.memory_space<vmem>>, vector<8x128xf32>
    tpu.vector_store %arg9[%c0_24, %c0_25], %42 {strides = array<i32>} : memref<8x128xf32, #tpu.memory_space<vmem>>, vector<8x128xf32>,
    return
  }
  func.func @transform_0(%arg0: i32) -> (i32, i32) {
    %c0_i32 = arith.constant 0 : i32
    %c0_i32_0 = arith.constant 0 : i32
    return %arg0, %c0_i32 : i32, i32
  }
  func.func @transform_1(%arg0: i32) -> (i32, i32) {
    %c0_i32 = arith.constant 0 : i32
    %c0_i32_0 = arith.constant 0 : i32
    return %arg0, %c0_i32 : i32, i32
  }
  func.func @transform_2(%arg0: i32) -> (i32, i32) {
    %c0_i32 = arith.constant 0 : i32
    %c0_i32_0 = arith.constant 0 : i32
    %c0_i32_1 = arith.constant 0 : i32
    return %c0_i32, %c0_i32_0 : i32, i32
  }
  func.func @transform_3(%arg0: i32) -> (i32, i32) {
    %c0_i32 = arith.constant 0 : i32
    %c0_i32_0 = arith.constant 0 : i32
    %c0_i32_1 = arith.constant 0 : i32
    return %c0_i32, %c0_i32_0 : i32, i32
  }
  func.func @transform_4(%arg0: i32) -> (i32, i32) {
    %c0_i32 = arith.constant 0 : i32
    %c0_i32_0 = arith.constant 0 : i32
    %c0_i32_1 = arith.constant 0 : i32
    return %c0_i32, %c0_i32_0 : i32, i32
  }
  func.func @transform_5(%arg0: i32) -> (i32, i32) {
    %c0_i32 = arith.constant 0 : i32
    %c0_i32_0 = arith.constant 0 : i32
    return %arg0, %c0_i32 : i32, i32
  }
  func.func @transform_6(%arg0: i32) -> (i32, i32) {
    %c0_i32 = arith.constant 0 : i32
    %c0_i32_0 = arith.constant 0 : i32
    return %arg0, %c0_i32 : i32, i32
  }
  func.func @transform_7(%arg0: i32) -> (i32, i32) {
    %c0_i32 = arith.constant 0 : i32
    %c0_i32_0 = arith.constant 0 : i32
    return %arg0, %c0_i32 : i32, i32
  }
  func.func @transform_8(%arg0: i32) -> (i32, i32) {
    %c0_i32 = arith.constant 0 : i32
    %c0_i32_0 = arith.constant 0 : i32
    return %arg0, %c0_i32 : i32, i32
  }
}

</mosaic_0001>

<llo_original>
// kernel: tpu_custom_call.1
$region0: #{tpu_custom_call.1}
  #allocation0 [shape = 'u32[]', space=smem, size = 0x4, offset = 0x4, fixed_abs, tag = 'smem constant byte address 0x4 - core index']
  #allocation1 [shape = 'u32[144,128]{1,0:T(1,128)}', space=vmem, size = 0x12000, scoped, tag = 'internal scratch']
  %s0 = inlined_call_operand.hbm [shape: bf16[8,128], index: 0, kind: input, shape index: {}]
  %s1 = inlined_call_operand.hbm [shape: bf16[8,128], index: 1, kind: input, shape index: {}]
  %s2 = inlined_call_operand.hbm [shape: bf16[128,128], index: 2, kind: input, shape index: {}]
  %s3 = inlined_call_operand.hbm [shape: bf16[128,128], index: 3, kind: input, shape index: {}]
  %s4 = inlined_call_operand.hbm [shape: bf16[128,128], index: 4, kind: input, shape index: {}]
  %s5 = inlined_call_operand.hbm [shape: f32[8,128], index: 5, kind: output, shape index: {0}]
  %s6 = inlined_call_operand.hbm [shape: f32[8,128], index: 6, kind: output, shape index: {1}]
  %s7 = inlined_call_operand.hbm [shape: f32[8,128], index: 7, kind: output, shape index: {2}]
  %s8 = inlined_call_operand.hbm [shape: f32[8,128], index: 8, kind: output, shape index: {3}]
  %9 = xla_tuple %s5, %s6, %s7, %s8
  %s10 = sld [smem:[#allocation0]]
  $region74: #{tpu_custom_call.1} parent=0
    _
  %s12 = ssub.s32 1, %s10
  %s13 = scalar_select 0, %s12, %s10
  $region1: #{tpu_custom_call.1} parent=0
    #allocation2 [shape = 'u8[2048]{0}', space=vmem, size = 0x800, scoped, tag = 'input window, operand 0, single buffered']
    #allocation3 [shape = 's32[1]{0}', space=sflag, size = 0x4, scoped, tag = 'scoped memory for tpu_custom_call.1']
    #allocation4 [shape = 's32[1]{0}', space=sflag, size = 0x4, scoped, tag = 'scoped memory for tpu_custom_call.1']
    #allocation5 [shape = 'u8[2048]{0}', space=vmem, size = 0x800, scoped, tag = 'input window, operand 1, single buffered']
    #allocation6 [shape = 's32[1]{0}', space=sflag, size = 0x4, scoped, tag = 'scoped memory for tpu_custom_call.1']
    #allocation7 [shape = 'u8[32768]{0}', space=vmem, size = 0x8000, scoped, tag = 'input window, operand 2, single buffered']
    #allocation8 [shape = 'u8[32768]{0}', space=vmem, size = 0x8000, scoped, tag = 'input window, operand 3, single buffered']
    #allocation9 [shape = 's32[1]{0}', space=sflag, size = 0x4, scoped, tag = 'scoped memory for tpu_custom_call.1']
    #allocation10 [shape = 'u8[32768]{0}', space=vmem, size = 0x8000, scoped, tag = 'input window, operand 4, single buffered']
    #allocation11 [shape = 'u8[4096]{0}', space=vmem, size = 0x1000, scoped, tag = 'output window, operand 0, single buffered']
    #allocation12 [shape = 'u8[4096]{0}', space=vmem, size = 0x1000, scoped, tag = 'output window, operand 1, single buffered']
    #allocation13 [shape = 's32[1]{0}', space=sflag, size = 0x4, scoped, tag = 'scoped memory for tpu_custom_call.1']
    #allocation14 [shape = 'u8[4096]{0}', space=vmem, size = 0x1000, scoped, tag = 'output window, operand 2, single buffered']
    #allocation15 [shape = 'u8[4096]{0}', space=vmem, size = 0x1000, scoped, tag = 'output window, operand 3, single buffered']
    #allocation16 [shape = 's32[1]{0}', space=sflag, size = 0x4, scoped, tag = 'scoped memory for tpu_custom_call.1']
    %14 = vsyncpa [#allocation3], 0
    %15 = vsyncpa [#allocation6], 0
    %16 = vsyncpa [#allocation9], 0
    %17 = vsyncpa [#allocation4], 0
    %18 = vsyncpa [#allocation13], 0
    %19 = vsyncpa [#allocation16], 0
    // Predicated region
    $region2: #{tpu_custom_call.1} parent=1 // pred_check
      _
    $region3: #{tpu_custom_call.1} parent=1 // pred_check_branch
      %21 = sbr.rel (0) target = $region5
    $region4: #{tpu_custom_call.1} parent=1 // pred_region
      %s23 = ssub.s32 64, 64
      %24 = vsyncadd [#allocation3], %s23
      %s26 = sshll.u32 [#allocation2], 4
      %s27 = int_to_ptr.vmem [resolvable:$true] %s26
      %29 = dma.hbm_to_vmem [thread:$0]  %s0, 64, %s27, [#allocation3]
    $region5: #{tpu_custom_call.1} parent=1 // pred_fallthru
      _
    // Predicated region
    $region6: #{tpu_custom_call.1} parent=1 // pred_check
      _
    $region7: #{tpu_custom_call.1} parent=1 // pred_check_branch
      %31 = sbr.rel (0) target = $region9
    $region8: #{tpu_custom_call.1} parent=1 // pred_region
      %s33 = ssub.s32 64, 64
      %34 = vsyncadd [#allocation6], %s33
      %s36 = sshll.u32 [#allocation5], 4
      %s37 = int_to_ptr.vmem [resolvable:$true] %s36
      %39 = dma.hbm_to_vmem [thread:$0]  %s1, 64, %s37, [#allocation6]
    $region9: #{tpu_custom_call.1} parent=1 // pred_fallthru
      _
    // Predicated region
    $region10: #{tpu_custom_call.1} parent=1 // pred_check
      _
    $region11: #{tpu_custom_call.1} parent=1 // pred_check_branch
      %41 = sbr.rel (0) target = $region13
    $region12: #{tpu_custom_call.1} parent=1 // pred_region
      %s43 = ssub.s32 1024, 1024
      %44 = vsyncadd [#allocation6], %s43
      %s45 = sshll.u32 [#allocation7], 4
      %s46 = int_to_ptr.vmem [resolvable:$true] %s45
      %51 = dma.hbm_to_vmem [thread:$0]  %s2, 1024, %s46, [#allocation6], 64, 64, 4
    $region13: #{tpu_custom_call.1} parent=1 // pred_fallthru
      _
    // Predicated region
    $region14: #{tpu_custom_call.1} parent=1 // pred_check
      _
    $region15: #{tpu_custom_call.1} parent=1 // pred_check_branch
      %53 = sbr.rel (0) target = $region17
    $region16: #{tpu_custom_call.1} parent=1 // pred_region
      %s55 = ssub.s32 1024, 1024
      %56 = vsyncadd [#allocation9], %s55
      %s57 = sshll.u32 [#allocation8], 4
      %s58 = int_to_ptr.vmem [resolvable:$true] %s57
      %63 = dma.hbm_to_vmem [thread:$0]  %s3, 1024, %s58, [#allocation9], 64, 64, 4
    $region17: #{tpu_custom_call.1} parent=1 // pred_fallthru
      _
    // Predicated region
    $region18: #{tpu_custom_call.1} parent=1 // pred_check
      _
    $region19: #{tpu_custom_call.1} parent=1 // pred_check_branch
      %65 = sbr.rel (0) target = $region21
    $region20: #{tpu_custom_call.1} parent=1 // pred_region
      %s67 = ssub.s32 1024, 1024
      %68 = vsyncadd [#allocation9], %s67
      %s69 = sshll.u32 [#allocation10], 4
      %s70 = int_to_ptr.vmem [resolvable:$true] %s69
      %75 = dma.hbm_to_vmem [thread:$0]  %s4, 1024, %s70, [#allocation9], 64, 64, 4
    $region21: #{tpu_custom_call.1} parent=1 // pred_fallthru
      _
    // Predicated region
    $region22: #{tpu_custom_call.1} parent=1 // pred_check
      _
    $region23: #{tpu_custom_call.1} parent=1 // pred_check_branch
      %77 = sbr.rel (0) target = $region25
    $region24: #{tpu_custom_call.1} parent=1 // pred_region
      %78 = dma.done [#allocation3], 64
    $region25: #{tpu_custom_call.1} parent=1 // pred_fallthru
      _
    // Predicated region
    $region26: #{tpu_custom_call.1} parent=1 // pred_check
      _
    $region27: #{tpu_custom_call.1} parent=1 // pred_check_branch
      %80 = sbr.rel (0) target = $region29
    $region28: #{tpu_custom_call.1} parent=1 // pred_region
      %81 = dma.done [#allocation6], 64
    $region29: #{tpu_custom_call.1} parent=1 // pred_fallthru
      _
    // Predicated region
    $region30: #{tpu_custom_call.1} parent=1 // pred_check
      _
    $region31: #{tpu_custom_call.1} parent=1 // pred_check_branch
      %83 = sbr.rel (0) target = $region33
    $region32: #{tpu_custom_call.1} parent=1 // pred_region
      %84 = dma.done [#allocation6], 1024
    $region33: #{tpu_custom_call.1} parent=1 // pred_fallthru
      _
    // Predicated region
    $region34: #{tpu_custom_call.1} parent=1 // pred_check
      _
    $region35: #{tpu_custom_call.1} parent=1 // pred_check_branch
      %86 = sbr.rel (0) target = $region37
    $region36: #{tpu_custom_call.1} parent=1 // pred_region
      %87 = dma.done [#allocation9], 1024
    $region37: #{tpu_custom_call.1} parent=1 // pred_fallthru
      _
    // Predicated region
    $region38: #{tpu_custom_call.1} parent=1 // pred_check
      _
    $region39: #{tpu_custom_call.1} parent=1 // pred_check_branch
      %89 = sbr.rel (0) target = $region41
    $region40: #{tpu_custom_call.1} parent=1 // pred_region
      %90 = dma.done [#allocation9], 1024
    $region41: #{tpu_custom_call.1} parent=1 // pred_fallthru
      _
    %v92 = vld [vmem:[#allocation2] sm:$0xf]
    %v93 = vld [vmem:[#allocation7] sm:$0xf]
    %v94 = vld [vmem:[#allocation7 + $0x4] sm:$0xf]
    %v95 = vld [vmem:[#allocation7 + $0x8] sm:$0xf]
    %v96 = vld [vmem:[#allocation7 + $0xc] sm:$0xf]
    %v97 = vld [vmem:[#allocation7 + $0x10] sm:$0xf]
    %v98 = vld [vmem:[#allocation7 + $0x14] sm:$0xf]
    %v99 = vld [vmem:[#allocation7 + $0x18] sm:$0xf]
    %v100 = vld [vmem:[#allocation7 + $0x1c] sm:$0xf]
    %v101 = vld [vmem:[#allocation7 + $0x20] sm:$0xf]
    %v102 = vld [vmem:[#allocation7 + $0x24] sm:$0xf]
    %v103 = vld [vmem:[#allocation7 + $0x28] sm:$0xf]
    %v104 = vld [vmem:[#allocation7 + $0x2c] sm:$0xf]
    %v105 = vld [vmem:[#allocation7 + $0x30] sm:$0xf]
    %v106 = vld [vmem:[#allocation7 + $0x34] sm:$0xf]
    %v107 = vld [vmem:[#allocation7 + $0x38] sm:$0xf]
    %v108 = vld [vmem:[#allocation7 + $0x3c] sm:$0xf]
    %v125 = vunpack.c.l.b16 %v93
    %v126 = vunpack.c.l.b16 %v94
    %v127 = vunpack.c.l.b16 %v95
    %v128 = vunpack.c.l.b16 %v96
    %v129 = vunpack.c.l.b16 %v97
    %v130 = vunpack.c.l.b16 %v98
    %v131 = vunpack.c.l.b16 %v99
    %v132 = vunpack.c.l.b16 %v100
    %v133 = vunpack.c.l.b16 %v101
    %v134 = vunpack.c.l.b16 %v102
    %v135 = vunpack.c.l.b16 %v103
    %v136 = vunpack.c.l.b16 %v104
    %v137 = vunpack.c.l.b16 %v105
    %v138 = vunpack.c.l.b16 %v106
    %v139 = vunpack.c.l.b16 %v107
    %v140 = vunpack.c.l.b16 %v108
    %v141 = vpack.c.b16 %v126, %v125
    %v142 = vpack.c.b16 %v128, %v127
    %v143 = vpack.c.b16 %v130, %v129
    %v144 = vpack.c.b16 %v132, %v131
    %v145 = vpack.c.b16 %v134, %v133
    %v146 = vpack.c.b16 %v136, %v135
    %v147 = vpack.c.b16 %v138, %v137
    %v148 = vpack.c.b16 %v140, %v139
    %157 = vmatprep.subr.bf16.mxu0 0
    %158 = vmatpush1.bf16.xpose.msra.mxu0 %v141
    %159 = vmatprep.subr.bf16.mxu0 0
    %160 = vmatpush1.bf16.xpose.msra.mxu0 %v142
    %161 = vmatprep.subr.bf16.mxu0 0
    %162 = vmatpush1.bf16.xpose.msra.mxu0 %v143
    %163 = vmatprep.subr.bf16.mxu0 0
    %164 = vmatpush1.bf16.xpose.msra.mxu0 %v144
    %165 = vmatprep.subr.bf16.mxu0 0
    %166 = vmatpush1.bf16.xpose.msra.mxu0 %v145
    %167 = vmatprep.subr.bf16.mxu0 0
    %168 = vmatpush1.bf16.xpose.msra.mxu0 %v146
    %169 = vmatprep.subr.bf16.mxu0 0
    %170 = vmatpush1.bf16.xpose.msra.mxu0 %v147
    %171 = vmatprep.subr.bf16.mxu0 0
    %172 = vmatpush1.bf16.xpose.msra.mxu0 %v148
    %173 = vmatprep.subr.bf16.mxu0 0
    %174 = vmatpush1.bf16.xpose.msra.mxu0 0
    %175 = vmatprep.subr.bf16.mxu0 0
    %176 = vmatpush1.bf16.xpose.msra.mxu0 0
    %177 = vmatprep.subr.bf16.mxu0 0
    %178 = vmatpush1.bf16.xpose.msra.mxu0 0
    %179 = vmatprep.subr.bf16.mxu0 0
    %180 = vmatpush1.bf16.xpose.msra.mxu0 0
    %181 = vmatprep.subr.bf16.mxu0 0
    %182 = vmatpush1.bf16.xpose.msra.mxu0 0
    %183 = vmatprep.subr.bf16.mxu0 0
    %184 = vmatpush1.bf16.xpose.msra.mxu0 0
    %185 = vmatprep.subr.bf16.mxu0 0
    %186 = vmatpush1.bf16.xpose.msra.mxu0 0
    %187 = vmatprep.subr.bf16.mxu0 0
    %188 = vmatpush1.bf16.xpose.msra.mxu0 0
    %189 = vmatprep.mubr.bf16.mxu0 0
    %190 = vmatmul.mubr.bf16.gmra.mrb[0].mxu0 %v92
    %v191 = vpop.f32.mrb[0].mxu0
    %v192 = vadd.f32 0.0, %v191
    %v193 = vpop.f32.mrb[0].mxu0
    %v194 = vpop.f32.mrb[0].mxu0
    %v195 = vpop.f32.mrb[0].mxu0
    %196 = vdwg.mxu0
    %v197 = vld [vmem:[#allocation5] sm:$0xf]
    %v198 = vld [vmem:[#allocation8] sm:$0xf]
    %v199 = vld [vmem:[#allocation8 + $0x4] sm:$0xf]
    %v200 = vld [vmem:[#allocation8 + $0x8] sm:$0xf]
    %v201 = vld [vmem:[#allocation8 + $0xc] sm:$0xf]
    %v202 = vld [vmem:[#allocation8 + $0x10] sm:$0xf]
    %v203 = vld [vmem:[#allocation8 + $0x14] sm:$0xf]
    %v204 = vld [vmem:[#allocation8 + $0x18] sm:$0xf]
    %v205 = vld [vmem:[#allocation8 + $0x1c] sm:$0xf]
    %v206 = vld [vmem:[#allocation8 + $0x20] sm:$0xf]
    %v207 = vld [vmem:[#allocation8 + $0x24] sm:$0xf]
    %v208 = vld [vmem:[#allocation8 + $0x28] sm:$0xf]
    %v209 = vld [vmem:[#allocation8 + $0x2c] sm:$0xf]
    %v210 = vld [vmem:[#allocation8 + $0x30] sm:$0xf]
    %v211 = vld [vmem:[#allocation8 + $0x34] sm:$0xf]
    %v212 = vld [vmem:[#allocation8 + $0x38] sm:$0xf]
    %v213 = vld [vmem:[#allocation8 + $0x3c] sm:$0xf]
    %v230 = vunpack.c.l.b16 %v198
    %v231 = vunpack.c.l.b16 %v199
    %v232 = vunpack.c.l.b16 %v200
    %v233 = vunpack.c.l.b16 %v201
    %v234 = vunpack.c.l.b16 %v202
    %v235 = vunpack.c.l.b16 %v203
    %v236 = vunpack.c.l.b16 %v204
    %v237 = vunpack.c.l.b16 %v205
    %v238 = vunpack.c.l.b16 %v206
    %v239 = vunpack.c.l.b16 %v207
    %v240 = vunpack.c.l.b16 %v208
    %v241 = vunpack.c.l.b16 %v209
    %v242 = vunpack.c.l.b16 %v210
    %v243 = vunpack.c.l.b16 %v211
    %v244 = vunpack.c.l.b16 %v212
    %v245 = vunpack.c.l.b16 %v213
    %v246 = vpack.c.b16 %v231, %v230
    %v247 = vpack.c.b16 %v233, %v232
    %v248 = vpack.c.b16 %v235, %v234
    %v249 = vpack.c.b16 %v237, %v236
    %v250 = vpack.c.b16 %v239, %v238
    %v251 = vpack.c.b16 %v241, %v240
    %v252 = vpack.c.b16 %v243, %v242
    %v253 = vpack.c.b16 %v245, %v244
    %262 = vmatprep.subr.bf16.mxu0 0
    %263 = vmatpush1.bf16.xpose.msra.mxu0 %v246
    %264 = vmatprep.subr.bf16.mxu0 0
    %265 = vmatpush1.bf16.xpose.msra.mxu0 %v247
    %266 = vmatprep.subr.bf16.mxu0 0
    %267 = vmatpush1.bf16.xpose.msra.mxu0 %v248
    %268 = vmatprep.subr.bf16.mxu0 0
    %269 = vmatpush1.bf16.xpose.msra.mxu0 %v249
    %270 = vmatprep.subr.bf16.mxu0 0
    %271 = vmatpush1.bf16.xpose.msra.mxu0 %v250
    %272 = vmatprep.subr.bf16.mxu0 0
    %273 = vmatpush1.bf16.xpose.msra.mxu0 %v251
    %274 = vmatprep.subr.bf16.mxu0 0
    %275 = vmatpush1.bf16.xpose.msra.mxu0 %v252
    %276 = vmatprep.subr.bf16.mxu0 0
    %277 = vmatpush1.bf16.xpose.msra.mxu0 %v253
    %278 = vmatprep.subr.bf16.mxu0 0
    %279 = vmatpush1.bf16.xpose.msra.mxu0 0
    %280 = vmatprep.subr.bf16.mxu0 0
    %281 = vmatpush1.bf16.xpose.msra.mxu0 0
    %282 = vmatprep.subr.bf16.mxu0 0
    %283 = vmatpush1.bf16.xpose.msra.mxu0 0
    %284 = vmatprep.subr.bf16.mxu0 0
    %285 = vmatpush1.bf16.xpose.msra.mxu0 0
    %286 = vmatprep.subr.bf16.mxu0 0
    %287 = vmatpush1.bf16.xpose.msra.mxu0 0
    %288 = vmatprep.subr.bf16.mxu0 0
    %289 = vmatpush1.bf16.xpose.msra.mxu0 0
    %290 = vmatprep.subr.bf16.mxu0 0
    %291 = vmatpush1.bf16.xpose.msra.mxu0 0
    %292 = vmatprep.subr.bf16.mxu0 0
    %293 = vmatpush1.bf16.xpose.msra.mxu0 0
    %294 = vmatprep.mubr.bf16.mxu0 0
    %295 = vmatmul.mubr.bf16.gmra.mrb[0].mxu0 %v197
    %v296 = vpop.f32.mrb[0].mxu0
    %v297 = vadd.f32 0.0, %v296
    %v298 = vpop.f32.mrb[0].mxu0
    %v299 = vpop.f32.mrb[0].mxu0
    %v300 = vpop.f32.mrb[0].mxu0
    %301 = vdwg.mxu0
    %v302 = vlaneseq
    %v303 = vand.u32 %v302, 127
    %vm304 = vcmp.lt.s32.totalorder %v303, 8
    %v305 = vsel %vm304, %v192, -inf
    %306 = vmax.xlane.f32.xlu0 %v305
    %v307 = vpop.xlane.xlu0 %306
    %v308 = vsub.f32 %v305, %v307
    %v309 = vmul.f32 %v308, 1.442695
    %v310 = vpow.pop %v309
    %311 = vadd.xlane.f32.xlu0 %v310
    %v312 = vpop.xlane.xlu0 %311
    %v313 = vrcp.pop %v312
    %v314 = vmul.f32 %v310, %v313
    %v315 = vsel %vm304, %v297, -inf
    %316 = vmax.xlane.f32.xlu0 %v315
    %v317 = vpop.xlane.xlu0 %316
    %v318 = vsub.f32 %v315, %v317
    %v319 = vmul.f32 %v318, 1.442695
    %v320 = vpow.pop %v319
    %321 = vadd.xlane.f32.xlu0 %v320
    %v322 = vpop.xlane.xlu0 %321
    %v323 = vrcp.pop %v322
    %v324 = vmul.f32 %v320, %v323
    %325 = vst [vmem:[#allocation11] sm:$0xff] %v192
    %326 = vst [vmem:[#allocation12] sm:$0xff] %v297
    %327 = vst [vmem:[#allocation14] sm:$0xff] %v324
    %v328 = vpack.c.bf16 %v324, %v324
    %v329 = vld [vmem:[#allocation10] sm:$0xf]
    %v330 = vld [vmem:[#allocation10 + $0x4] sm:$0xf]
    %v331 = vld [vmem:[#allocation10 + $0x8] sm:$0xf]
    %v332 = vld [vmem:[#allocation10 + $0xc] sm:$0xf]
    %v333 = vld [vmem:[#allocation10 + $0x10] sm:$0xf]
    %v334 = vld [vmem:[#allocation10 + $0x14] sm:$0xf]
    %v335 = vld [vmem:[#allocation10 + $0x18] sm:$0xf]
    %v336 = vld [vmem:[#allocation10 + $0x1c] sm:$0xf]
    %v337 = vld [vmem:[#allocation10 + $0x20] sm:$0xf]
    %v338 = vld [vmem:[#allocation10 + $0x24] sm:$0xf]
    %v339 = vld [vmem:[#allocation10 + $0x28] sm:$0xf]
    %v340 = vld [vmem:[#allocation10 + $0x2c] sm:$0xf]
    %v341 = vld [vmem:[#allocation10 + $0x30] sm:$0xf]
    %v342 = vld [vmem:[#allocation10 + $0x34] sm:$0xf]
    %v343 = vld [vmem:[#allocation10 + $0x38] sm:$0xf]
    %v344 = vld [vmem:[#allocation10 + $0x3c] sm:$0xf]
    %v361 = vunpack.c.l.b16 %v329
    %v362 = vunpack.c.l.b16 %v330
    %v363 = vunpack.c.l.b16 %v331
    %v364 = vunpack.c.l.b16 %v332
    %v365 = vunpack.c.l.b16 %v333
    %v366 = vunpack.c.l.b16 %v334
    %v367 = vunpack.c.l.b16 %v335
    %v368 = vunpack.c.l.b16 %v336
    %v369 = vunpack.c.l.b16 %v337
    %v370 = vunpack.c.l.b16 %v338
    %v371 = vunpack.c.l.b16 %v339
    %v372 = vunpack.c.l.b16 %v340
    %v373 = vunpack.c.l.b16 %v341
    %v374 = vunpack.c.l.b16 %v342
    %v375 = vunpack.c.l.b16 %v343
    %v376 = vunpack.c.l.b16 %v344
    %v377 = vpack.c.b16 %v362, %v361
    %v378 = vpack.c.b16 %v364, %v363
    %v379 = vpack.c.b16 %v366, %v365
    %v380 = vpack.c.b16 %v368, %v367
    %v381 = vpack.c.b16 %v370, %v369
    %v382 = vpack.c.b16 %v372, %v371
    %v383 = vpack.c.b16 %v374, %v373
    %v384 = vpack.c.b16 %v376, %v375
    %393 = vmatprep.subr.bf16.mxu0 0
    %394 = vmatpush1.bf16.xpose.msra.mxu0 %v377
    %395 = vmatprep.subr.bf16.mxu0 0
    %396 = vmatpush1.bf16.xpose.msra.mxu0 %v378
    %397 = vmatprep.subr.bf16.mxu0 0
    %398 = vmatpush1.bf16.xpose.msra.mxu0 %v379
    %399 = vmatprep.subr.bf16.mxu0 0
    %400 = vmatpush1.bf16.xpose.msra.mxu0 %v380
    %401 = vmatprep.subr.bf16.mxu0 0
    %402 = vmatpush1.bf16.xpose.msra.mxu0 %v381
    %403 = vmatprep.subr.bf16.mxu0 0
    %404 = vmatpush1.bf16.xpose.msra.mxu0 %v382
    %405 = vmatprep.subr.bf16.mxu0 0
    %406 = vmatpush1.bf16.xpose.msra.mxu0 %v383
    %407 = vmatprep.subr.bf16.mxu0 0
    %408 = vmatpush1.bf16.xpose.msra.mxu0 %v384
    %409 = vmatprep.subr.bf16.mxu0 0
    %410 = vmatpush1.bf16.xpose.msra.mxu0 0
    %411 = vmatprep.subr.bf16.mxu0 0
    %412 = vmatpush1.bf16.xpose.msra.mxu0 0
    %413 = vmatprep.subr.bf16.mxu0 0
    %414 = vmatpush1.bf16.xpose.msra.mxu0 0
    %415 = vmatprep.subr.bf16.mxu0 0
    %416 = vmatpush1.bf16.xpose.msra.mxu0 0
    %417 = vmatprep.subr.bf16.mxu0 0
    %418 = vmatpush1.bf16.xpose.msra.mxu0 0
    %419 = vmatprep.subr.bf16.mxu0 0
    %420 = vmatpush1.bf16.xpose.msra.mxu0 0
    %421 = vmatprep.subr.bf16.mxu0 0
    %422 = vmatpush1.bf16.xpose.msra.mxu0 0
    %423 = vmatprep.subr.bf16.mxu0 0
    %424 = vmatpush1.bf16.xpose.msra.mxu0 0
    %425 = vmatprep.mubr.bf16.mxu0 0
    %426 = vmatmul.mubr.bf16.gmra.mrb[0].mxu0 %v328
    %v427 = vpop.f32.mrb[0].mxu0
    %v428 = vadd.f32 0.0, %v427
    %v429 = vpop.f32.mrb[0].mxu0
    %v430 = vpop.f32.mrb[0].mxu0
    %v431 = vpop.f32.mrb[0].mxu0
    %432 = vdwg.mxu0
    %v433 = vmul.f32 %v428, %v314
    %434 = vst [vmem:[#allocation15] sm:$0xff] %v433
    // Predicated region
    $region42: #{tpu_custom_call.1} parent=1 // pred_check
      _
    $region43: #{tpu_custom_call.1} parent=1 // pred_check_branch
      %436 = sbr.rel (0) target = $region45
    $region44: #{tpu_custom_call.1} parent=1 // pred_region
      %s438 = ssub.s32 128, 128
      %439 = vsyncadd [#allocation4], %s438
      %s441 = sshll.u32 [#allocation11], 4
      %s442 = int_to_ptr.vmem [resolvable:$true] %s441
      %444 = dma.vmem_to_hbm [thread:$0]  %s442, 128, %s5, [#allocation4]
    $region45: #{tpu_custom_call.1} parent=1 // pred_fallthru
      _
    // Predicated region
    $region46: #{tpu_custom_call.1} parent=1 // pred_check
      _
    $region47: #{tpu_custom_call.1} parent=1 // pred_check_branch
      %446 = sbr.rel (0) target = $region49
    $region48: #{tpu_custom_call.1} parent=1 // pred_region
      %s448 = ssub.s32 128, 128
      %449 = vsyncadd [#allocation13], %s448
      %s451 = sshll.u32 [#allocation12], 4
      %s452 = int_to_ptr.vmem [resolvable:$true] %s451
      %454 = dma.vmem_to_hbm [thread:$0]  %s452, 128, %s6, [#allocation13]
    $region49: #{tpu_custom_call.1} parent=1 // pred_fallthru
      _
    // Predicated region
    $region50: #{tpu_custom_call.1} parent=1 // pred_check
      _
    $region51: #{tpu_custom_call.1} parent=1 // pred_check_branch
      %456 = sbr.rel (0) target = $region53
    $region52: #{tpu_custom_call.1} parent=1 // pred_region
      %s458 = ssub.s32 128, 128
      %459 = vsyncadd [#allocation13], %s458
      %s461 = sshll.u32 [#allocation14], 4
      %s462 = int_to_ptr.vmem [resolvable:$true] %s461
      %464 = dma.vmem_to_hbm [thread:$0]  %s462, 128, %s7, [#allocation13]
    $region53: #{tpu_custom_call.1} parent=1 // pred_fallthru
      _
    // Predicated region
    $region54: #{tpu_custom_call.1} parent=1 // pred_check
      _
    $region55: #{tpu_custom_call.1} parent=1 // pred_check_branch
      %466 = sbr.rel (0) target = $region57
    $region56: #{tpu_custom_call.1} parent=1 // pred_region
      %s468 = ssub.s32 128, 128
      %469 = vsyncadd [#allocation16], %s468
      %s471 = sshll.u32 [#allocation15], 4
      %s472 = int_to_ptr.vmem [resolvable:$true] %s471
      %474 = dma.vmem_to_hbm [thread:$0]  %s472, 128, %s8, [#allocation16]
    $region57: #{tpu_custom_call.1} parent=1 // pred_fallthru
      _
    // Predicated region
    $region58: #{tpu_custom_call.1} parent=1 // pred_check
      _
    $region59: #{tpu_custom_call.1} parent=1 // pred_check_branch
      %476 = sbr.rel (0) target = $region61
    $region60: #{tpu_custom_call.1} parent=1 // pred_region
      %477 = dma.done [#allocation4], 128
    $region61: #{tpu_custom_call.1} parent=1 // pred_fallthru
      _
    // Predicated region
    $region62: #{tpu_custom_call.1} parent=1 // pred_check
      _
    $region63: #{tpu_custom_call.1} parent=1 // pred_check_branch
      %479 = sbr.rel (0) target = $region65
    $region64: #{tpu_custom_call.1} parent=1 // pred_region
      %480 = dma.done [#allocation13], 128
    $region65: #{tpu_custom_call.1} parent=1 // pred_fallthru
      _
    // Predicated region
    $region66: #{tpu_custom_call.1} parent=1 // pred_check
      _
    $region67: #{tpu_custom_call.1} parent=1 // pred_check_branch
      %482 = sbr.rel (0) target = $region69
    $region68: #{tpu_custom_call.1} parent=1 // pred_region
      %483 = dma.done [#allocation13], 128
    $region69: #{tpu_custom_call.1} parent=1 // pred_fallthru
      _
    // Predicated region
    $region70: #{tpu_custom_call.1} parent=1 // pred_check
      _
    $region71: #{tpu_custom_call.1} parent=1 // pred_check_branch
      %485 = sbr.rel (0) target = $region73
    $region72: #{tpu_custom_call.1} parent=1 // pred_region
      %486 = dma.done [#allocation16], 128
    $region73: #{tpu_custom_call.1} parent=1 // pred_fallthru
      _
    %487 = vsyncpa [#allocation3], 1
    %488 = vsyncpa [#allocation6], 1
    %489 = vsyncpa [#allocation9], 1
    %490 = vsyncpa [#allocation4], 1
    %491 = vsyncpa [#allocation13], 1
    %492 = vsyncpa [#allocation16], 1

</llo_original>
